<compile_context>
chip_gen: v5e
topology: v5e:2x2
jax: 0.10.0
libtpu: 0.0.40
codegen_flags: <defaults>
</compile_context>

<pallas_src>
from functools import partial

import jax
import jax.numpy as jnp
from jax import lax
from jax.experimental import pallas as pl
from jax.experimental.pallas import tpu as pltpu


def _round_up(x, m):
    return (x + m - 1) // m * m


def _fasttext_kernel(tok_ref, cat_ref, emb_ref, cf_ref, wt_ref, b_ref,
                     out_ref, *, V0, V1, padding_idx):
    f32 = jnp.float32
    bf16 = jnp.bfloat16
    TB, L = tok_ref.shape
    Vp, _ = emb_ref.shape
    VCp, _ = cf_ref.shape

    tok = tok_ref[...]                                               # (TB, L) int32

    # ---- per-row token-count matrix cnt[b, v] = #occurrences of token v in
    # row b. Counts are small integers (<= L), exact in bf16, so cnt feeds the
    # MXU in bf16 at native rate (f32 accumulation via preferred_element_type).
    iota_v = lax.broadcasted_iota(jnp.int32, (TB, L, Vp), 2)
    cnt = jnp.sum((tok[:, :, None] == iota_v).astype(f32), axis=1)    # (TB, Vp)
    cnt = cnt.astype(bf16)

    # ---- fused pooled sum: single matmul, padding row of emb is all-zero so
    # padding tokens contribute nothing.
    pooled_sum = jnp.dot(cnt, emb_ref[...], preferred_element_type=f32)  # (TB, Dp)

    # ---- non-padding token counts: tiny VPU reduce over the (TB, L) block.
    # (Same mask semantics as the reference's x.sum(-1)!=0 as long as only the
    # padding row of the embedding table is all-zero.)
    counts = jnp.sum((tok != padding_idx).astype(f32), axis=1, keepdims=True)
    inv = pl.reciprocal(jnp.maximum(counts, 1.0), approx=True)        # EUP slot
    pooled = pooled_sum * inv                                         # (TB, Dp)
    # (no nan_to_num needed: counts are clamped >= 1)

    # ---- both categorical features in a single bf16 one-hot matmul against
    # the stacked, FC-folded tables (ids clamped as in the module).
    cat = cat_ref[...]                                                # (TB, 2)
    ids0 = jnp.clip(cat[:, 0:1], 0, V0 - 1)
    ids1 = jnp.clip(cat[:, 1:2], 0, V1 - 1) + V0
    iota_c = lax.broadcasted_iota(jnp.int32, (TB, VCp), 1)
    oh_cat = jnp.logical_or(iota_c == ids0, iota_c == ids1).astype(bf16)
    cat_out = jnp.dot(oh_cat, cf_ref[...], preferred_element_type=f32)  # (TB, Kp)

    # ---- fc on the text part + folded categorical contribution + bias
    out = (jnp.dot(pooled, wt_ref[...], preferred_element_type=f32)
           + cat_out + b_ref[...])                                    # (TB, Kp)
    out_ref[...] = out.astype(out_ref.dtype)


def fasttext_forward(tokens, cat_ids, params, *, block_b=128, padding_idx=0):
    """tokens: (B, L) int32, cat_ids: (B, 2) int32 -> (B, num_classes) f32."""
    emb, c0, c1, w, b = (params["emb"], params["cat0"], params["cat1"],
                         params["fc_w"], params["fc_b"])
    B, L = tokens.shape
    V, D = emb.shape
    D0 = c0.shape[1]
    K = w.shape[1]
    V0, V1 = c0.shape[0], c1.shape[0]
    VC = V0 + V1

    # Lane / MXU aligned padded dims (lane padding is free in VMEM; converts
    # ragged 33/10/15-wide arrays into unmasked, lane-dense ops).
    Kp = _round_up(K, 128)
    Dp = _round_up(D, 128)
    Vp = _round_up(V, 128)
    VCp = _round_up(VC, 128)

    # ---- adaptive batch tile: largest TB <= block_b whose padding waste stays
    # below ~12.5% of the padded batch (keeps >=2 grid steps for real batches
    # so v7x's two TensorCores both get work).
    TB = min(block_b, _round_up(B, 8))
    while TB > 8:
        b_pad = _round_up(B, TB)
        if (b_pad - B) * 8 <= b_pad:
            break
        TB = max(8, _round_up(TB // 2, 8))
    B_pad = _round_up(B, TB)

    # ---- host-side param prep (layout plumbing, done once per call) ----------
    # Text table in bf16 (deliberate precision tradeoff; accumulation stays
    # f32), zero-padded to (Vp, Dp).
    emb_p = jnp.zeros((Vp, Dp), jnp.bfloat16).at[:V, :D].set(
        emb.astype(jnp.bfloat16))

    # Fold categorical embedding tables into the FC weights; stack; pad; bf16.
    c0f = c0 @ w[D:D + D0]                                            # (V0, K)
    c1f = c1 @ w[D + D0:]                                             # (V1, K)
    cf = jnp.concatenate([c0f, c1f], axis=0)                          # (VC, K)
    cf_p = jnp.zeros((VCp, Kp), jnp.bfloat16).at[:VC, :K].set(
        cf.astype(jnp.bfloat16))
    w_text_p = jnp.zeros((Dp, Kp), jnp.float32).at[:D, :K].set(
        w[:D].astype(jnp.float32))
    b_p = jnp.zeros((1, Kp), jnp.float32).at[0, :K].set(b.astype(jnp.float32))

    # Pad the batch so it tiles by TB (padded rows: padding tokens / cat id 0,
    # dropped when slicing the output).
    tok = jnp.pad(tokens.astype(jnp.int32), ((0, B_pad - B), (0, 0)),
                  constant_values=padding_idx)
    cat = jnp.pad(cat_ids.astype(jnp.int32), ((0, B_pad - B), (0, 0)))

    grid = (B_pad // TB,)
    kernel = partial(_fasttext_kernel, V0=V0, V1=V1, padding_idx=padding_idx)

    # Explicit VMEM budget (v5e scoped default is only 16 MiB): double-buffered
    # invariant tables + pipelined tiles + elementwise intermediates, with
    # headroom, clamped to v7x's 64 MiB physical VMEM.
    table_bytes = Vp * Dp * 2 + VCp * Kp * 2 + Dp * Kp * 4 + Kp * 4
    tile_bytes = TB * L * 4 + TB * 2 * 4 + TB * Kp * 4
    inter_bytes = TB * L * Vp * 4 + TB * Vp * 4 + TB * Dp * 4 + 2 * TB * Kp * 4
    vmem_limit = int(min(64 << 20,
                         max(32 << 20,
                             2 * (table_bytes + tile_bytes) + inter_bytes
                             + (2 << 20))))

    out = pl.pallas_call(
        kernel,
        out_shape=jax.ShapeDtypeStruct((B_pad, Kp), jnp.float32),
        grid_spec=pltpu.PrefetchScalarGridSpec(
            num_scalar_prefetch=0,
            grid=grid,
            in_specs=[
                pl.BlockSpec((TB, L), lambda i: (i, 0)),          # token ids
                pl.BlockSpec((TB, 2), lambda i: (i, 0)),          # cat ids
                pl.BlockSpec((Vp, Dp), lambda i: (0, 0)),         # text table (resident)
                pl.BlockSpec((VCp, Kp), lambda i: (0, 0)),        # folded cat tables
                pl.BlockSpec((Dp, Kp), lambda i: (0, 0)),         # fc text weights
                pl.BlockSpec((1, Kp), lambda i: (0, 0)),          # bias
            ],
            out_specs=pl.BlockSpec((TB, Kp), lambda i: (i, 0)),
        ),
        compiler_params=pltpu.CompilerParams(
            dimension_semantics=("parallel",),
            vmem_limit_bytes=vmem_limit),
    )(tok, cat, emb_p, cf_p, w_text_p, b_p)

    return out[:B, :K]


def reference_forward(tokens, cat_ids, params):
    """Pure-JAX f32 reference mirroring the PyTorch forward."""
    emb, c0, c1, w, b = (params["emb"], params["cat0"], params["cat1"],
                         params["fc_w"], params["fc_b"])
    x = jnp.take(emb, tokens, axis=0)                                 # (B, L, D)
    mask = (x.sum(-1) != 0).astype(jnp.float32)                       # (B, L)
    counts = mask.sum(-1, keepdims=True)
    x_text = (x * mask[..., None]).sum(axis=1) / jnp.maximum(counts, 1.0)
    x_text = jnp.nan_to_num(x_text, 0.0)
    e0 = jnp.take(c0, jnp.clip(cat_ids[:, 0], 0, c0.shape[0] - 1), axis=0)
    e1 = jnp.take(c1, jnp.clip(cat_ids[:, 1], 0, c1.shape[0] - 1), axis=0)
    x_comb = jnp.concatenate([x_text, e0, e1], axis=1)
    return x_comb @ w + b


if __name__ == "__main__":
    # Model config (matches FastTextModel(__init__) shapes):
    #   embedding_dim=32, num_rows=100, num_classes=10, padding_idx=0,
    #   categorical_vocabulary_sizes=[6, 9], categorical_embedding_dims=[16, 8]
    B, L = 2, 8
    V, D = 100, 32
    K = 10
    V0, D0 = 6, 16
    V1, D1 = 9, 8
    dim_in = D + D0 + D1

    key = jax.random.PRNGKey(0)
    k_emb, k_c0, k_c1, k_w, k_b, k_tok, k_cat = jax.random.split(key, 7)

    emb = 0.1 * jax.random.normal(k_emb, (V, D), jnp.float32)
    emb = emb.at[0].set(0.0)                                          # padding_idx=0
    cat0 = 0.1 * jax.random.normal(k_c0, (V0, D0), jnp.float32)
    cat1 = 0.1 * jax.random.normal(k_c1, (V1, D1), jnp.float32)
    fc_w = 0.1 * jax.random.normal(k_w, (dim_in, K), jnp.float32)     # = torch W.T
    fc_b = 0.1 * jax.random.normal(k_b, (K,), jnp.float32)
    params = dict(emb=emb, cat0=cat0, cat1=cat1, fc_w=fc_w, fc_b=fc_b)

    tokens = jax.random.randint(k_tok, (B, L), 1, V).astype(jnp.int32)
    tokens = tokens.at[0, 5:].set(0)                                  # padded tail
    tokens = tokens.at[1, 3:].set(0)
    cat_ids = jax.random.randint(k_cat, (B, 2), 0, 6).astype(jnp.int32)

    out = jax.block_until_ready(fasttext_forward(tokens, cat_ids, params))
    ref = jax.block_until_ready(reference_forward(tokens, cat_ids, params))
    assert out.shape == (B, K)
    # Tolerance covers bf16 rounding of the text table and folded categorical
    # tables (one-hot / counts stay exact; accumulation is f32; approx recip
    # error ~2^-12).
    assert jnp.allclose(out, ref, atol=5e-3, rtol=5e-3)
    print("KERNEL_OK")
</pallas_src>

<mosaic_0001>
module attributes {stable_mosaic.version = 11 : i64} {
  func.func @_fasttext_kernel(%arg0: i32, %arg1: memref<8x8xi32, #tpu.memory_space<vmem>>, %arg2: memref<8x2xi32, #tpu.memory_space<vmem>>, %arg3: memref<128x128xbf16, #tpu.memory_space<vmem>>, %arg4: memref<128x128xbf16, #tpu.memory_space<vmem>>, %arg5: memref<128x128xf32, #tpu.memory_space<vmem>>, %arg6: memref<1x128xf32, #tpu.memory_space<vmem>>, %arg7: memref<8x128xf32, #tpu.memory_space<vmem>>) attributes {dimension_semantics = [#tpu.dimension_semantics<parallel>], iteration_bounds = array<i64: 1>, scalar_prefetch = 0 : i64, scratch_operands = 0 : i64, tpu.core_type = #tpu.core_type<tc>, window_params = [{transform_indices = @transform_0, window_bounds = array<i64: 8, 8>}, {transform_indices = @transform_1, window_bounds = array<i64: 8, 2>}, {pipeline_mode = #tpu.pipeline_mode<synchronous>, transform_indices = @transform_2, window_bounds = array<i64: 128, 128>}, {pipeline_mode = #tpu.pipeline_mode<synchronous>, transform_indices = @transform_3, window_bounds = array<i64: 128, 128>}, {pipeline_mode = #tpu.pipeline_mode<synchronous>, transform_indices = @transform_4, window_bounds = array<i64: 128, 128>}, {pipeline_mode = #tpu.pipeline_mode<synchronous>, transform_indices = @transform_5, window_bounds = array<i64: 1, 128>}, {transform_indices = @transform_6, window_bounds = array<i64: 8, 128>}]} {
    %c0 = arith.constant 0 : index
    %c0_0 = arith.constant 0 : index
    %0 = vector.load %arg1[%c0, %c0_0] : memref<8x8xi32, #tpu.memory_space<vmem>>, vector<8x8xi32>
    %1 = tpu.iota {dimensions = array<i32: 2>} : vector<8x8x128xi32>
    %2 = vector.shape_cast %0 : vector<8x8xi32> to vector<8x8x1xi32>
    %3 = vector.broadcast %2 : vector<8x8x1xi32> to vector<8x8x128xi32>
    %4 = arith.cmpi eq, %3, %1 : vector<8x8x128xi32>
    %5 = arith.extui %4 : vector<8x8x128xi1> to vector<8x8x128xi32>
    %6 = arith.sitofp %5 : vector<8x8x128xi32> to vector<8x8x128xf32>
    %cst = arith.constant dense<0.000000e+00> : vector<8x128xf32>
    %7 = vector.multi_reduction <add>, %6, %cst [1] : vector<8x8x128xf32> to vector<8x128xf32>
    %8 = arith.truncf %7 : vector<8x128xf32> to vector<8x128xbf16>
    %c0_1 = arith.constant 0 : index
    %c0_2 = arith.constant 0 : index
    %9 = vector.load %arg3[%c0_1, %c0_2] : memref<128x128xbf16, #tpu.memory_space<vmem>>, vector<128x128xbf16>
    %cst_3 = arith.constant dense<0.000000e+00> : vector<8x128xf32>
    %10 = tpu.matmul %8, %9, %cst_3 {dimension_numbers = #tpu.dot_dimension_numbers<[1], [0], [0], [1], [0, 0, 1, 1], [], []>} : vector<8x128xbf16>, vector<128x128xbf16>, vector<8x128xf32> -> vector<8x128xf32>
    %c0_i32 = arith.constant 0 : i32
    %11 = vector.broadcast %c0_i32 : i32 to vector<8x8xi32>
    %12 = arith.cmpi ne, %0, %11 : vector<8x8xi32>
    %13 = arith.extui %12 : vector<8x8xi1> to vector<8x8xi32>
    %14 = arith.sitofp %13 : vector<8x8xi32> to vector<8x8xf32>
    %cst_4 = arith.constant dense<0.000000e+00> : vector<8xf32>
    %15 = vector.multi_reduction <add>, %14, %cst_4 [1] : vector<8x8xf32> to vector<8xf32>
    %16 = vector.shape_cast %15 : vector<8xf32> to vector<8x1xf32>
    %cst_5 = arith.constant 1.000000e+00 : f32
    %17 = vector.broadcast %cst_5 : f32 to vector<8x1xf32>
    %18 = arith.maximumf %16, %17 : vector<8x1xf32>
    %19 = tpu.reciprocal %18 {approx = true} : vector<8x1xf32> -> vector<8x1xf32>
    %20 = vector.broadcast %19 : vector<8x1xf32> to vector<8x128xf32>
    %21 = arith.mulf %10, %20 : vector<8x128xf32>
    %c0_6 = arith.constant 0 : index
    %c0_7 = arith.constant 0 : index
    %22 = vector.load %arg2[%c0_6, %c0_7] : memref<8x2xi32, #tpu.memory_space<vmem>>, vector<8x2xi32>
    %23 = vector.extract_strided_slice %22 {offsets = [0, 0], sizes = [8, 1], strides = [1, 1]} : vector<8x2xi32> to vector<8x1xi32>
    %c0_i32_8 = arith.constant 0 : i32
    %c5_i32 = arith.constant 5 : i32
    %24 = vector.broadcast %c0_i32_8 : i32 to vector<8x1xi32>
    %25 = arith.maxsi %24, %23 : vector<8x1xi32>
    %26 = vector.broadcast %c5_i32 : i32 to vector<8x1xi32>
    %27 = arith.minsi %26, %25 : vector<8x1xi32>
    %28 = vector.extract_strided_slice %22 {offsets = [0, 1], sizes = [8, 1], strides = [1, 1]} : vector<8x2xi32> to vector<8x1xi32>
    %c0_i32_9 = arith.constant 0 : i32
    %c8_i32 = arith.constant 8 : i32
    %29 = vector.broadcast %c0_i32_9 : i32 to vector<8x1xi32>
    %30 = arith.maxsi %29, %28 : vector<8x1xi32>
    %31 = vector.broadcast %c8_i32 : i32 to vector<8x1xi32>
    %32 = arith.minsi %31, %30 : vector<8x1xi32>
    %c6_i32 = arith.constant 6 : i32
    %33 = vector.broadcast %c6_i32 : i32 to vector<8x1xi32>
    %34 = arith.addi %32, %33 : vector<8x1xi32>
    %35 = tpu.iota {dimensions = array<i32: 1>} : vector<8x128xi32>
    %36 = vector.broadcast %27 : vector<8x1xi32> to vector<8x128xi32>
    %37 = arith.cmpi eq, %35, %36 : vector<8x128xi32>
    %38 = vector.broadcast %34 : vector<8x1xi32> to vector<8x128xi32>
    %39 = arith.cmpi eq, %35, %38 : vector<8x128xi32>
    %40 = arith.ori %37, %39 : vector<8x128xi1>
    %41 = arith.extui %40 : vector<8x128xi1> to vector<8x128xi32>
    %42 = arith.sitofp %41 : vector<8x128xi32> to vector<8x128xf32>
    %43 = arith.truncf %42 : vector<8x128xf32> to vector<8x128xbf16>
    %c0_10 = arith.constant 0 : index
    %c0_11 = arith.constant 0 : index
    %44 = vector.load %arg4[%c0_10, %c0_11] : memref<128x128xbf16, #tpu.memory_space<vmem>>, vector<128x128xbf16>
    %cst_12 = arith.constant dense<0.000000e+00> : vector<8x128xf32>
    %45 = tpu.matmul %43, %44, %cst_12 {dimension_numbers = #tpu.dot_dimension_numbers<[1], [0], [0], [1], [0, 0, 1, 1], [], []>} : vector<8x128xbf16>, vector<128x128xbf16>, vector<8x128xf32> -> vector<8x128xf32>
    %c0_13 = arith.constant 0 : index
    %c0_14 = arith.constant 0 : index
    %46 = vector.load %arg5[%c0_13, %c0_14] : memref<128x128xf32, #tpu.memory_space<vmem>>, vector<128x128xf32>
    %cst_15 = arith.constant dense<0.000000e+00> : vector<8x128xf32>
    %47 = tpu.matmul %21, %46, %cst_15 {dimension_numbers = #tpu.dot_dimension_numbers<[1], [0], [0], [1], [0, 0, 1, 1], [], []>} : vector<8x128xf32>, vector<128x128xf32>, vector<8x128xf32> -> vector<8x128xf32>
    %48 = arith.addf %47, %45 : vector<8x128xf32>
    %c0_16 = arith.constant 0 : index
    %c0_17 = arith.constant 0 : index
    %49 = vector.load %arg6[%c0_16, %c0_17] : memref<1x128xf32, #tpu.memory_space<vmem>>, vector<1x128xf32>
    %50 = vector.broadcast %49 : vector<1x128xf32> to vector<8x128xf32>
    %51 = arith.addf %48, %50 : vector<8x128xf32>
    %c0_18 = arith.constant 0 : index
    %c0_19 = arith.constant 0 : index
    %52 = vector.load %arg7[%c0_18, %c0_19] : memref<8x128xf32, #tpu.memory_space<vmem>>, vector<8x128xf32>
    tpu.vector_store %arg7[%c0_18, %c0_19], %51 {strides = array<i32>} : memref<8x128xf32, #tpu.memory_space<vmem>>, vector<8x128xf32>,
    return
  }
  func.func @transform_0(%arg0: i32) -> (i32, i32) {
    %c0_i32 = arith.constant 0 : i32
    %c0_i32_0 = arith.constant 0 : i32
    return %arg0, %c0_i32 : i32, i32
  }
  func.func @transform_1(%arg0: i32) -> (i32, i32) {
    %c0_i32 = arith.constant 0 : i32
    %c0_i32_0 = arith.constant 0 : i32
    return %arg0, %c0_i32 : i32, i32
  }
  func.func @transform_2(%arg0: i32) -> (i32, i32) {
    %c0_i32 = arith.constant 0 : i32
    %c0_i32_0 = arith.constant 0 : i32
    %c0_i32_1 = arith.constant 0 : i32
    return %c0_i32, %c0_i32_0 : i32, i32
  }
  func.func @transform_3(%arg0: i32) -> (i32, i32) {
    %c0_i32 = arith.constant 0 : i32
    %c0_i32_0 = arith.constant 0 : i32
    %c0_i32_1 = arith.constant 0 : i32
    return %c0_i32, %c0_i32_0 : i32, i32
  }
  func.func @transform_4(%arg0: i32) -> (i32, i32) {
    %c0_i32 = arith.constant 0 : i32
    %c0_i32_0 = arith.constant 0 : i32
    %c0_i32_1 = arith.constant 0 : i32
    return %c0_i32, %c0_i32_0 : i32, i32
  }
  func.func @transform_5(%arg0: i32) -> (i32, i32) {
    %c0_i32 = arith.constant 0 : i32
    %c0_i32_0 = arith.constant 0 : i32
    %c0_i32_1 = arith.constant 0 : i32
    return %c0_i32, %c0_i32_0 : i32, i32
  }
  func.func @transform_6(%arg0: i32) -> (i32, i32) {
    %c0_i32 = arith.constant 0 : i32
    %c0_i32_0 = arith.constant 0 : i32
    return %arg0, %c0_i32 : i32, i32
  }
}

</mosaic_0001>

<llo_original>
// kernel: tpu_custom_call.1
$region0: #{tpu_custom_call.1}
  #allocation0 [shape = 'u32[]', space=smem, size = 0x4, offset = 0x4, fixed_abs, tag = 'smem constant byte address 0x4 - core index']
  #allocation1 [shape = 'u32[72,128]{1,0:T(1,128)}', space=vmem, size = 0x9000, scoped, tag = 'internal scratch']
  %s0 = inlined_call_operand.vmem [shape: s32[8,8], index: 0, kind: input, shape index: {}]
  %s1 = inlined_call_operand.vmem [shape: s32[8,2], index: 1, kind: input, shape index: {}]
  %s2 = inlined_call_operand.hbm [shape: bf16[128,128], index: 2, kind: input, shape index: {}]
  %s3 = inlined_call_operand.hbm [shape: bf16[128,128], index: 3, kind: input, shape index: {}]
  %s4 = inlined_call_operand.hbm [shape: f32[128,128], index: 4, kind: input, shape index: {}]
  %s5 = inlined_call_operand.vmem [shape: f32[1,128], index: 5, kind: input, shape index: {}]
  %s6 = inlined_call_operand.hbm [shape: f32[8,128], index: 6, kind: output, shape index: {}]
  %s7 = sld [smem:[#allocation0]]
  $region46: #{tpu_custom_call.1} parent=0
    _
  %s9 = ssub.s32 1, %s7
  %s10 = scalar_select 0, %s9, %s7
  $region1: #{tpu_custom_call.1} parent=0
    #allocation2 [shape = 'u8[32768]{0}', space=vmem, size = 0x8000, scoped, tag = 'input window, operand 2, single buffered']
    #allocation3 [shape = 's32[1]{0}', space=sflag, size = 0x4, scoped, tag = 'scoped memory for tpu_custom_call.1']
    #allocation4 [shape = 's32[1]{0}', space=sflag, size = 0x4, scoped, tag = 'scoped memory for tpu_custom_call.1']
    #allocation5 [shape = 'u8[32768]{0}', space=vmem, size = 0x8000, scoped, tag = 'input window, operand 3, single buffered']
    #allocation6 [shape = 's32[1]{0}', space=sflag, size = 0x4, scoped, tag = 'scoped memory for tpu_custom_call.1']
    #allocation7 [shape = 'u8[65536]{0}', space=vmem, size = 0x10000, scoped, tag = 'input window, operand 4, single buffered']
    #allocation8 [shape = 'u8[4096]{0}', space=vmem, size = 0x1000, scoped, tag = 'output window, operand 0, single buffered']
    %11 = vsyncpa [#allocation3], 0
    %12 = vsyncpa [#allocation6], 0
    %13 = vsyncpa [#allocation4], 0
    // Predicated region
    $region2: #{tpu_custom_call.1} parent=1 // pred_check
      _
    $region3: #{tpu_custom_call.1} parent=1 // pred_check_branch
      %15 = sbr.rel (0) target = $region5
    $region4: #{tpu_custom_call.1} parent=1 // pred_region
      _
    $region5: #{tpu_custom_call.1} parent=1 // pred_fallthru
      _
    // Predicated region
    $region6: #{tpu_custom_call.1} parent=1 // pred_check
      _
    $region7: #{tpu_custom_call.1} parent=1 // pred_check_branch
      %17 = sbr.rel (0) target = $region9
    $region8: #{tpu_custom_call.1} parent=1 // pred_region
      _
    $region9: #{tpu_custom_call.1} parent=1 // pred_fallthru
      _
    // Predicated region
    $region10: #{tpu_custom_call.1} parent=1 // pred_check
      _
    $region11: #{tpu_custom_call.1} parent=1 // pred_check_branch
      %19 = sbr.rel (0) target = $region13
    $region12: #{tpu_custom_call.1} parent=1 // pred_region
      %21 = vsyncadd [#allocation3], 0
      %s22 = sshll.u32 %s2, 4
      %s23 = int_to_ptr.hbm [resolvable:$true] %s22
      %s24 = sshll.u32 [#allocation2], 4
      %s25 = int_to_ptr.vmem [resolvable:$true] %s24
      %30 = dma.hbm_to_vmem [thread:$0]  %s23, 1024, %s25, [#allocation3], 64, 64, 4
    $region13: #{tpu_custom_call.1} parent=1 // pred_fallthru
      _
    // Predicated region
    $region14: #{tpu_custom_call.1} parent=1 // pred_check
      _
    $region15: #{tpu_custom_call.1} parent=1 // pred_check_branch
      %32 = sbr.rel (0) target = $region17
    $region16: #{tpu_custom_call.1} parent=1 // pred_region
      %34 = vsyncadd [#allocation6], 0
      %s35 = sshll.u32 %s3, 4
      %s36 = int_to_ptr.hbm [resolvable:$true] %s35
      %s37 = sshll.u32 [#allocation5], 4
      %s38 = int_to_ptr.vmem [resolvable:$true] %s37
      %43 = dma.hbm_to_vmem [thread:$0]  %s36, 1024, %s38, [#allocation6], 64, 64, 4
    $region17: #{tpu_custom_call.1} parent=1 // pred_fallthru
      _
    // Predicated region
    $region18: #{tpu_custom_call.1} parent=1 // pred_check
      _
    $region19: #{tpu_custom_call.1} parent=1 // pred_check_branch
      %45 = sbr.rel (0) target = $region21
    $region20: #{tpu_custom_call.1} parent=1 // pred_region
      %47 = vsyncadd [#allocation6], 0
      %s48 = sshll.u32 %s4, 4
      %s49 = int_to_ptr.hbm [resolvable:$true] %s48
      %s50 = sshll.u32 [#allocation7], 4
      %s51 = int_to_ptr.vmem [resolvable:$true] %s50
      %56 = dma.hbm_to_vmem [thread:$0]  %s49, 2048, %s51, [#allocation6], 128, 128, 8
    $region21: #{tpu_custom_call.1} parent=1 // pred_fallthru
      _
    // Predicated region
    $region22: #{tpu_custom_call.1} parent=1 // pred_check
      _
    $region23: #{tpu_custom_call.1} parent=1 // pred_check_branch
      %58 = sbr.rel (0) target = $region25
    $region24: #{tpu_custom_call.1} parent=1 // pred_region
      _
    $region25: #{tpu_custom_call.1} parent=1 // pred_fallthru
      _
    // Predicated region
    $region26: #{tpu_custom_call.1} parent=1 // pred_check
      _
    $region27: #{tpu_custom_call.1} parent=1 // pred_check_branch
      %60 = sbr.rel (0) target = $region29
    $region28: #{tpu_custom_call.1} parent=1 // pred_region
      %62 = dma.done [#allocation3], 1024
    $region29: #{tpu_custom_call.1} parent=1 // pred_fallthru
      _
    // Predicated region
    $region30: #{tpu_custom_call.1} parent=1 // pred_check
      _
    $region31: #{tpu_custom_call.1} parent=1 // pred_check_branch
      %64 = sbr.rel (0) target = $region33
    $region32: #{tpu_custom_call.1} parent=1 // pred_region
      %66 = dma.done [#allocation6], 1024
    $region33: #{tpu_custom_call.1} parent=1 // pred_fallthru
      _
    // Predicated region
    $region34: #{tpu_custom_call.1} parent=1 // pred_check
      _
    $region35: #{tpu_custom_call.1} parent=1 // pred_check_branch
      %68 = sbr.rel (0) target = $region37
    $region36: #{tpu_custom_call.1} parent=1 // pred_region
      %70 = dma.done [#allocation6], 2048
    $region37: #{tpu_custom_call.1} parent=1 // pred_fallthru
      _
    %v71 = vld [vmem:[%s0] sm:$0xff]
    %v72 = vlaneseq
    %v73 = vand.u32 %v72, 127
    %v74 = vperm.slane %v71, 0
    %v75 = vlaneseq
    %v76 = vshrl.u32 %v75, 7
    %78 = vset.pattern.permute.xlu0 %v76
    %79 = vperm.xlu0 %78, %v74
    %v80 = vpop.permute.xlu0 %79
    %v81 = vperm.slane %v71, 1
    %v82 = vlaneseq
    %v83 = vshrl.u32 %v82, 7
    %85 = vset.pattern.permute.xlu0 %v83
    %86 = vperm.xlu0 %85, %v81
    %v87 = vpop.permute.xlu0 %86
    %v88 = vperm.slane %v71, 2
    %v89 = vlaneseq
    %v90 = vshrl.u32 %v89, 7
    %92 = vset.pattern.permute.xlu0 %v90
    %93 = vperm.xlu0 %92, %v88
    %v94 = vpop.permute.xlu0 %93
    %v95 = vperm.slane %v71, 3
    %v96 = vlaneseq
    %v97 = vshrl.u32 %v96, 7
    %99 = vset.pattern.permute.xlu0 %v97
    %100 = vperm.xlu0 %99, %v95
    %v101 = vpop.permute.xlu0 %100
    %v102 = vperm.slane %v71, 4
    %v103 = vlaneseq
    %v104 = vshrl.u32 %v103, 7
    %106 = vset.pattern.permute.xlu0 %v104
    %107 = vperm.xlu0 %106, %v102
    %v108 = vpop.permute.xlu0 %107
    %v109 = vperm.slane %v71, 5
    %v110 = vlaneseq
    %v111 = vshrl.u32 %v110, 7
    %113 = vset.pattern.permute.xlu0 %v111
    %114 = vperm.xlu0 %113, %v109
    %v115 = vpop.permute.xlu0 %114
    %v116 = vperm.slane %v71, 6
    %v117 = vlaneseq
    %v118 = vshrl.u32 %v117, 7
    %120 = vset.pattern.permute.xlu0 %v118
    %121 = vperm.xlu0 %120, %v116
    %v122 = vpop.permute.xlu0 %121
    %v123 = vperm.slane %v71, 7
    %v124 = vlaneseq
    %v125 = vshrl.u32 %v124, 7
    %127 = vset.pattern.permute.xlu0 %v125
    %128 = vperm.xlu0 %127, %v123
    %v129 = vpop.permute.xlu0 %128
    %vm130 = vcmp.eq.s32.totalorder %v80, %v73
    %vm131 = vcmp.eq.s32.totalorder %v87, %v73
    %vm132 = vcmp.eq.s32.totalorder %v94, %v73
    %vm133 = vcmp.eq.s32.totalorder %v101, %v73
    %vm134 = vcmp.eq.s32.totalorder %v108, %v73
    %vm135 = vcmp.eq.s32.totalorder %v115, %v73
    %vm136 = vcmp.eq.s32.totalorder %v122, %v73
    %vm137 = vcmp.eq.s32.totalorder %v129, %v73
    %v138 = vsel %vm130, 1, 0
    %v139 = vsel %vm131, 1, 0
    %v140 = vsel %vm132, 1, 0
    %v141 = vsel %vm133, 1, 0
    %v142 = vsel %vm134, 1, 0
    %v143 = vsel %vm135, 1, 0
    %v144 = vsel %vm136, 1, 0
    %v145 = vsel %vm137, 1, 0
    %v146 = vcvt.s32.f32 %v138
    %v147 = vcvt.s32.f32 %v139
    %v148 = vcvt.s32.f32 %v140
    %v149 = vcvt.s32.f32 %v141
    %v150 = vcvt.s32.f32 %v142
    %v151 = vcvt.s32.f32 %v143
    %v152 = vcvt.s32.f32 %v144
    %v153 = vcvt.s32.f32 %v145
    %v154 = vrot.slane %v146, 4
    %v155 = vadd.f32 %v146, %v154
    %v156 = vrot.slane %v155, 2
    %v157 = vadd.f32 %v155, %v156
    %v158 = vrot.slane %v157, 1
    %v159 = vadd.f32 %v157, %v158
    %v160 = vrot.slane %v147, 4
    %v161 = vadd.f32 %v147, %v160
    %v162 = vrot.slane %v161, 2
    %v163 = vadd.f32 %v161, %v162
    %v164 = vrot.slane %v163, 1
    %v165 = vadd.f32 %v163, %v164
    %v166 = vrot.slane %v148, 4
    %v167 = vadd.f32 %v148, %v166
    %v168 = vrot.slane %v167, 2
    %v169 = vadd.f32 %v167, %v168
    %v170 = vrot.slane %v169, 1
    %v171 = vadd.f32 %v169, %v170
    %v172 = vrot.slane %v149, 4
    %v173 = vadd.f32 %v149, %v172
    %v174 = vrot.slane %v173, 2
    %v175 = vadd.f32 %v173, %v174
    %v176 = vrot.slane %v175, 1
    %v177 = vadd.f32 %v175, %v176
    %v178 = vrot.slane %v150, 4
    %v179 = vadd.f32 %v150, %v178
    %v180 = vrot.slane %v179, 2
    %v181 = vadd.f32 %v179, %v180
    %v182 = vrot.slane %v181, 1
    %v183 = vadd.f32 %v181, %v182
    %v184 = vrot.slane %v151, 4
    %v185 = vadd.f32 %v151, %v184
    %v186 = vrot.slane %v185, 2
    %v187 = vadd.f32 %v185, %v186
    %v188 = vrot.slane %v187, 1
    %v189 = vadd.f32 %v187, %v188
    %v190 = vrot.slane %v152, 4
    %v191 = vadd.f32 %v152, %v190
    %v192 = vrot.slane %v191, 2
    %v193 = vadd.f32 %v191, %v192
    %v194 = vrot.slane %v193, 1
    %v195 = vadd.f32 %v193, %v194
    %v196 = vrot.slane %v153, 4
    %v197 = vadd.f32 %v153, %v196
    %v198 = vrot.slane %v197, 2
    %v199 = vadd.f32 %v197, %v198
    %v200 = vrot.slane %v199, 1
    %v201 = vadd.f32 %v199, %v200
    %v202 = vpack.c.bf16 %v159, %v159
    %v203 = vpack.c.bf16 %v165, %v165
    %v204 = vpack.c.bf16 %v171, %v171
    %v205 = vpack.c.bf16 %v177, %v177
    %v206 = vpack.c.bf16 %v183, %v183
    %v207 = vpack.c.bf16 %v189, %v189
    %v208 = vpack.c.bf16 %v195, %v195
    %v209 = vpack.c.bf16 %v201, %v201
    %v210 = vld [vmem:[#allocation2] sm:$0xf]
    %v211 = vld [vmem:[#allocation2 + $0x4] sm:$0xf]
    %v212 = vld [vmem:[#allocation2 + $0x8] sm:$0xf]
    %v213 = vld [vmem:[#allocation2 + $0xc] sm:$0xf]
    %v214 = vld [vmem:[#allocation2 + $0x10] sm:$0xf]
    %v215 = vld [vmem:[#allocation2 + $0x14] sm:$0xf]
    %v216 = vld [vmem:[#allocation2 + $0x18] sm:$0xf]
    %v217 = vld [vmem:[#allocation2 + $0x1c] sm:$0xf]
    %v218 = vld [vmem:[#allocation2 + $0x20] sm:$0xf]
    %v219 = vld [vmem:[#allocation2 + $0x24] sm:$0xf]
    %v220 = vld [vmem:[#allocation2 + $0x28] sm:$0xf]
    %v221 = vld [vmem:[#allocation2 + $0x2c] sm:$0xf]
    %v222 = vld [vmem:[#allocation2 + $0x30] sm:$0xf]
    %v223 = vld [vmem:[#allocation2 + $0x34] sm:$0xf]
    %v224 = vld [vmem:[#allocation2 + $0x38] sm:$0xf]
    %v225 = vld [vmem:[#allocation2 + $0x3c] sm:$0xf]
    %v234 = vunpack.c.l.b16 %v202
    %v235 = vunpack.c.l.b16 %v203
    %v236 = vunpack.c.l.b16 %v204
    %v237 = vunpack.c.l.b16 %v205
    %v238 = vunpack.c.l.b16 %v206
    %v239 = vunpack.c.l.b16 %v207
    %v240 = vunpack.c.l.b16 %v208
    %v241 = vunpack.c.l.b16 %v209
    %vm242 = vcmask 1041409
    %v243 = vsel %vm242, %v235, %v234
    %vm244 = vcmask 1042434
    %v245 = vsel %vm244, %v236, %v243
    %vm246 = vcmask 1043459
    %v247 = vsel %vm246, %v237, %v245
    %vm248 = vcmask 1044484
    %v249 = vsel %vm248, %v238, %v247
    %vm250 = vcmask 1045509
    %v251 = vsel %vm250, %v239, %v249
    %vm252 = vcmask 1046534
    %v253 = vsel %vm252, %v240, %v251
    %vm254 = vcmask 1047559
    %v255 = vsel %vm254, %v241, %v253
    %v256 = vpack.c.b16 %v255, %v255
    %v274 = vunpack.c.l.b16 %v210
    %v275 = vunpack.c.l.b16 %v211
    %v276 = vunpack.c.l.b16 %v212
    %v277 = vunpack.c.l.b16 %v213
    %v278 = vunpack.c.l.b16 %v214
    %v279 = vunpack.c.l.b16 %v215
    %v280 = vunpack.c.l.b16 %v216
    %v281 = vunpack.c.l.b16 %v217
    %v282 = vunpack.c.l.b16 %v218
    %v283 = vunpack.c.l.b16 %v219
    %v284 = vunpack.c.l.b16 %v220
    %v285 = vunpack.c.l.b16 %v221
    %v286 = vunpack.c.l.b16 %v222
    %v287 = vunpack.c.l.b16 %v223
    %v288 = vunpack.c.l.b16 %v224
    %v289 = vunpack.c.l.b16 %v225
    %v290 = vpack.c.b16 %v275, %v274
    %v291 = vpack.c.b16 %v277, %v276
    %v292 = vpack.c.b16 %v279, %v278
    %v293 = vpack.c.b16 %v281, %v280
    %v294 = vpack.c.b16 %v283, %v282
    %v295 = vpack.c.b16 %v285, %v284
    %v296 = vpack.c.b16 %v287, %v286
    %v297 = vpack.c.b16 %v289, %v288
    %306 = vmatpush.bf16.msra.mxu0 %v297
    %307 = vmatpush.bf16.msra.mxu0 %v296
    %308 = vmatpush.bf16.msra.mxu0 %v295
    %309 = vmatpush.bf16.msra.mxu0 %v294
    %310 = vmatpush.bf16.msra.mxu0 %v293
    %311 = vmatpush.bf16.msra.mxu0 %v292
    %312 = vmatpush.bf16.msra.mxu0 %v291
    %313 = vmatpush.bf16.msra.mxu0 %v290
    %314 = vmatmul.bf16.gmra.mxu0 %v256
    %v315 = vpop.f32.mrf.mxu0
    %v316 = vadd.f32 0.0, %v315
    %v317 = vpop.f32.mrf.mxu0
    %318 = vdwg.mxu0
    %vm319 = vcmp.ne.s32.totalorder %v71, 0
    %v320 = vsel %vm319, 1, 0
    %v321 = vcvt.s32.f32 %v320
    %vm322 = vcmask 64512
    %v323 = vsel %vm322, %v321, 0.0
    %324 = vadd.xlane.f32.xlu0 %v323
    %v325 = vpop.xlane.xlu0 %324
    %v326 = vmax.f32 %v325, 1.0
    %v327 = vrcp.pop %v326
    %v328 = vmul.f32 %v316, %v327
    %v329 = vld [vmem:[%s1] sm:$0xff]
    %vm330 = vcmp.gt.s32.totalorder %v329, 0
    %v331 = vsel %vm330, %v329, 0
    %vm332 = vcmp.lt.s32.totalorder %v331, 5
    %v333 = vsel %vm332, %v331, 5
    %vm334 = vcmp.lt.s32.totalorder %v331, 8
    %v335 = vsel %vm334, %v331, 8
    %v336 = vadd.s32 %v335, 6
    %337 = vset.pattern.permute.xlu0 0
    %338 = vperm.xlu0 %337, %v333
    %v339 = vpop.permute.xlu0 %338
    %vm340 = vcmp.eq.s32.totalorder %v73, %v339
    %341 = vset.pattern.permute.xlu0 1
    %342 = vperm.xlu0 %341, %v336
    %v343 = vpop.permute.xlu0 %342
    %vm344 = vcmp.eq.s32.totalorder %v73, %v343
    %vm345 = vmor %vm340, %vm344
    %v346 = vsel %vm345, 1, 0
    %v347 = vcvt.s32.f32 %v346
    %v348 = vpack.c.bf16 %v347, %v347
    %v349 = vld [vmem:[#allocation5] sm:$0xf]
    %v350 = vld [vmem:[#allocation5 + $0x4] sm:$0xf]
    %v351 = vld [vmem:[#allocation5 + $0x8] sm:$0xf]
    %v352 = vld [vmem:[#allocation5 + $0xc] sm:$0xf]
    %v353 = vld [vmem:[#allocation5 + $0x10] sm:$0xf]
    %v354 = vld [vmem:[#allocation5 + $0x14] sm:$0xf]
    %v355 = vld [vmem:[#allocation5 + $0x18] sm:$0xf]
    %v356 = vld [vmem:[#allocation5 + $0x1c] sm:$0xf]
    %v357 = vld [vmem:[#allocation5 + $0x20] sm:$0xf]
    %v358 = vld [vmem:[#allocation5 + $0x24] sm:$0xf]
    %v359 = vld [vmem:[#allocation5 + $0x28] sm:$0xf]
    %v360 = vld [vmem:[#allocation5 + $0x2c] sm:$0xf]
    %v361 = vld [vmem:[#allocation5 + $0x30] sm:$0xf]
    %v362 = vld [vmem:[#allocation5 + $0x34] sm:$0xf]
    %v363 = vld [vmem:[#allocation5 + $0x38] sm:$0xf]
    %v364 = vld [vmem:[#allocation5 + $0x3c] sm:$0xf]
    %v381 = vunpack.c.l.b16 %v349
    %v382 = vunpack.c.l.b16 %v350
    %v383 = vunpack.c.l.b16 %v351
    %v384 = vunpack.c.l.b16 %v352
    %v385 = vunpack.c.l.b16 %v353
    %v386 = vunpack.c.l.b16 %v354
    %v387 = vunpack.c.l.b16 %v355
    %v388 = vunpack.c.l.b16 %v356
    %v389 = vunpack.c.l.b16 %v357
    %v390 = vunpack.c.l.b16 %v358
    %v391 = vunpack.c.l.b16 %v359
    %v392 = vunpack.c.l.b16 %v360
    %v393 = vunpack.c.l.b16 %v361
    %v394 = vunpack.c.l.b16 %v362
    %v395 = vunpack.c.l.b16 %v363
    %v396 = vunpack.c.l.b16 %v364
    %v397 = vpack.c.b16 %v382, %v381
    %v398 = vpack.c.b16 %v384, %v383
    %v399 = vpack.c.b16 %v386, %v385
    %v400 = vpack.c.b16 %v388, %v387
    %v401 = vpack.c.b16 %v390, %v389
    %v402 = vpack.c.b16 %v392, %v391
    %v403 = vpack.c.b16 %v394, %v393
    %v404 = vpack.c.b16 %v396, %v395
    %413 = vmatpush.bf16.msra.mxu0 %v404
    %414 = vmatpush.bf16.msra.mxu0 %v403
    %415 = vmatpush.bf16.msra.mxu0 %v402
    %416 = vmatpush.bf16.msra.mxu0 %v401
    %417 = vmatpush.bf16.msra.mxu0 %v400
    %418 = vmatpush.bf16.msra.mxu0 %v399
    %419 = vmatpush.bf16.msra.mxu0 %v398
    %420 = vmatpush.bf16.msra.mxu0 %v397
    %421 = vmatmul.bf16.gmra.mxu0 %v348
    %v422 = vpop.f32.mrf.mxu0
    %v423 = vadd.f32 0.0, %v422
    %v424 = vpop.f32.mrf.mxu0
    %425 = vdwg.mxu0
    %v426 = vld [vmem:[#allocation7] sm:$0xff]
    %v427 = vld [vmem:[#allocation7 + $0x8] sm:$0xff]
    %v428 = vld [vmem:[#allocation7 + $0x10] sm:$0xff]
    %v429 = vld [vmem:[#allocation7 + $0x18] sm:$0xff]
    %v430 = vld [vmem:[#allocation7 + $0x20] sm:$0xff]
    %v431 = vld [vmem:[#allocation7 + $0x28] sm:$0xff]
    %v432 = vld [vmem:[#allocation7 + $0x30] sm:$0xff]
    %v433 = vld [vmem:[#allocation7 + $0x38] sm:$0xff]
    %v434 = vld [vmem:[#allocation7 + $0x40] sm:$0xff]
    %v435 = vld [vmem:[#allocation7 + $0x48] sm:$0xff]
    %v436 = vld [vmem:[#allocation7 + $0x50] sm:$0xff]
    %v437 = vld [vmem:[#allocation7 + $0x58] sm:$0xff]
    %v438 = vld [vmem:[#allocation7 + $0x60] sm:$0xff]
    %v439 = vld [vmem:[#allocation7 + $0x68] sm:$0xff]
    %v440 = vld [vmem:[#allocation7 + $0x70] sm:$0xff]
    %v441 = vld [vmem:[#allocation7 + $0x78] sm:$0xff]
    %442 = vmatpush.msra.mxu0 %v441
    %443 = vmatpush.msra.mxu0 %v440
    %444 = vmatpush.msra.mxu0 %v439
    %445 = vmatpush.msra.mxu0 %v438
    %446 = vmatpush.msra.mxu0 %v437
    %447 = vmatpush.msra.mxu0 %v436
    %448 = vmatpush.msra.mxu0 %v435
    %449 = vmatpush.msra.mxu0 %v434
    %450 = vmatpush.msra.mxu0 %v433
    %451 = vmatpush.msra.mxu0 %v432
    %452 = vmatpush.msra.mxu0 %v431
    %453 = vmatpush.msra.mxu0 %v430
    %454 = vmatpush.msra.mxu0 %v429
    %455 = vmatpush.msra.mxu0 %v428
    %456 = vmatpush.msra.mxu0 %v427
    %457 = vmatpush.msra.mxu0 %v426
    %458 = vmatmul.f32.gmra.mxu0 %v328
    %v459 = vpop.f32.mrf.mxu0
    %v460 = vadd.f32 %v423, %v459
    %461 = vdwg.mxu0
    %v462 = vld [vmem:[%s5] sm:$0x1]
    %v464 = vperm.slane %v462, 0
    %v466 = vadd.f32 %v460, %v464
    %467 = vst [vmem:[#allocation8] sm:$0xff] %v466
    // Predicated region
    $region38: #{tpu_custom_call.1} parent=1 // pred_check
      _
    $region39: #{tpu_custom_call.1} parent=1 // pred_check_branch
      %469 = sbr.rel (0) target = $region41
    $region40: #{tpu_custom_call.1} parent=1 // pred_region
      %471 = vsyncadd [#allocation4], 0
      %s473 = sshll.u32 [#allocation8], 4
      %s474 = int_to_ptr.vmem [resolvable:$true] %s473
      %s475 = sshll.u32 %s6, 4
      %s476 = int_to_ptr.hbm [resolvable:$true] %s475
      %478 = dma.vmem_to_hbm [thread:$0]  %s474, 128, %s476, [#allocation4]
    $region41: #{tpu_custom_call.1} parent=1 // pred_fallthru
      _
    // Predicated region
    $region42: #{tpu_custom_call.1} parent=1 // pred_check
      _
    $region43: #{tpu_custom_call.1} parent=1 // pred_check_branch
      %480 = sbr.rel (0) target = $region45
    $region44: #{tpu_custom_call.1} parent=1 // pred_region
      %482 = dma.done [#allocation4], 128
    $region45: #{tpu_custom_call.1} parent=1 // pred_fallthru
      _
    %483 = vsyncpa [#allocation3], 1
    %484 = vsyncpa [#allocation6], 1
    %485 = vsyncpa [#allocation4], 1

</llo_original>
